<compile_context>
chip_gen: v6e
topology: v6e:2x2x1
jax: 0.10.0
libtpu: 0.0.40
codegen_flags: <defaults>
</compile_context>

<pallas_src>
import jax
import jax.numpy as jnp
from jax.experimental import pallas as pl
from jax.experimental.pallas import tpu as pltpu

_EPS = 1e-5
_LANE = 128   # pad every feature dim up to this -> lane-dense vregs & stores
_SUBLANE = 8  # f32 sublane tile
_MAX_TB = 256  # batch tile for the grid


# ----------------------------------------------------------------------------
# generate_layer_dims (dependency of MLPCSVExtractor, not provided — simple
# deterministic reimplementation)
# ----------------------------------------------------------------------------
def generate_layer_dims(input_dim, n_layers, n_units, output_dim, structure):
    if structure == "pyramid":
        dims = [max(output_dim, n_units // (2 ** i)) for i in range(n_layers)]
    else:  # "constant" (default)
        dims = [n_units] * n_layers
    dims.append(output_dim)
    return dims


def _round_up(n, m):
    return ((n + m - 1) // m) * m


# ----------------------------------------------------------------------------
# Fused Pallas kernel: entire MLP (all blocks) in one kernel body.
# Block structure ('kinds') is static and baked in via closure; activations
# stay in vregs/VMEM across layers.
# ----------------------------------------------------------------------------
def _make_fused_kernel(kinds):
    """kinds: tuple of 'basic' | 'res_identity' | 'res_proj' (static Python)."""

    def kernel(x_ref, *rest):
        o_ref = rest[-1]
        wb = rest[:-1]  # alternating (w, b) per block, BN already folded in
        x = x_ref[...]
        for i, kind in enumerate(kinds):
            w = wb[2 * i][...]
            b = wb[2 * i + 1][...]
            # DEFAULT precision: single bf16 MXU pass, f32 accumulation.
            h = jnp.dot(x, w, preferred_element_type=jnp.float32) + b
            if kind == "res_proj":
                # w is (Din_pad, 2*Dpad): [ main | shortcut ] — single MXU push
                # on v6e/v7x (N=256 matches the MXU tile), split at a 128-lane
                # boundary (no cross-lane work).
                dpad = w.shape[1] // 2
                main = h[:, :dpad]
                short = h[:, dpad:]
                x = main * jax.nn.sigmoid(main) + short
            elif kind == "res_identity":
                x = h * jax.nn.sigmoid(h) + x
            else:  # basic
                x = h * jax.nn.sigmoid(h)
        o_ref[...] = x

    return kernel


# ----------------------------------------------------------------------------
# MLPCSVExtractor in JAX (parameter setup is plain JAX; hot path is one
# fused Pallas call with a batch-parallel grid)
# ----------------------------------------------------------------------------
class MLPCSVExtractorPallas:
    def __init__(self, config, key):
        params = config["params"]
        self.name = config["name"]
        self.use_norm = params["use_norm"]
        input_dim = params["input_dim"]
        hidden_dims = generate_layer_dims(
            input_dim, params["n_layers"], params["n_units"],
            params["output_dim"], params["structure"])

        self.input_dim = input_dim
        self.in_pad = _round_up(input_dim, _LANE)

        # ---- raw (PyTorch-equivalent) parameters, kept for the reference ----
        self.blocks = []  # (kind, raw_params, in_dim, out_dim)
        prev = input_dim
        for h in hidden_dims:
            key, k_w, k_b, k_sw, k_sb, k_g, k_be, k_mu, k_v = jax.random.split(key, 9)
            bound = 1.0 / jnp.sqrt(prev)
            p = {
                "w": jax.random.uniform(k_w, (prev, h), jnp.float32, -bound, bound),
                "b": jax.random.uniform(k_b, (1, h), jnp.float32, -bound, bound),
                # deterministic, non-trivial BN eval statistics / affine params
                "gamma": 1.0 + 0.05 * jax.random.normal(k_g, (1, h), jnp.float32),
                "beta": 0.05 * jax.random.normal(k_be, (1, h), jnp.float32),
                "mean": 0.1 * jax.random.normal(k_mu, (1, h), jnp.float32),
                "var": 1.0 + 0.1 * jax.random.uniform(k_v, (1, h), jnp.float32),
            }
            if self.name == "res":
                if prev != h:
                    p["sw"] = jax.random.uniform(k_sw, (prev, h), jnp.float32, -bound, bound)
                    p["sb"] = jax.random.uniform(k_sb, (1, h), jnp.float32, -bound, bound)
                    kind = "res_proj"
                else:
                    kind = "res_identity"
            else:
                kind = "basic"
            self.blocks.append((kind, p, prev, h))
            prev = h

        self.output_dim = prev
        self.out_pad = _round_up(prev, _LANE)
        self.kinds = tuple(k for (k, _, _, _) in self.blocks)

        # ---- BN-folded + lane-padded weights, for both norm/no-norm paths ----
        self._packed = {
            True: self._pack_params(apply_norm=True),
            False: self._pack_params(apply_norm=False),
        }

    def _pack_params(self, apply_norm):
        """Fold eval-BN into (W, b), zero-pad dims to 128 lanes, concat shortcut."""
        packed = []
        for kind, p, din, dout in self.blocks:
            din_pad = _round_up(din, _LANE)
            dout_pad = _round_up(dout, _LANE)
            if apply_norm:
                s = p["gamma"] * jax.lax.rsqrt(p["var"] + _EPS)        # (1, dout)
                w_eff = p["w"] * s                                      # col-scale
                b_eff = (p["b"] - p["mean"]) * s + p["beta"]
            else:
                w_eff = p["w"]
                b_eff = p["b"]
            w_pad = jnp.zeros((din_pad, dout_pad), jnp.float32)
            w_pad = w_pad.at[:din, :dout].set(w_eff)
            b_pad = jnp.zeros((1, dout_pad), jnp.float32)
            b_pad = b_pad.at[:, :dout].set(b_eff)
            if kind == "res_proj":
                sw_pad = jnp.zeros((din_pad, dout_pad), jnp.float32)
                sw_pad = sw_pad.at[:din, :dout].set(p["sw"])
                sb_pad = jnp.zeros((1, dout_pad), jnp.float32)
                sb_pad = sb_pad.at[:, :dout].set(p["sb"])
                w_pad = jnp.concatenate([w_pad, sw_pad], axis=1)  # (din_pad, 2*dout_pad)
                b_pad = jnp.concatenate([b_pad, sb_pad], axis=1)
            packed.append((w_pad, b_pad))
        return packed

    def __call__(self, x):
        # BatchNorm only applied when batch > 1 (mirrors PyTorch forward);
        # static decision since batch size is static here.
        apply_norm = bool(self.use_norm and x.shape[0] > 1)
        packed = self._packed[apply_norm]
        B = x.shape[0]

        # batch tiling: TB rows per grid step, batch-parallel across cores
        tb = min(_MAX_TB, _round_up(B, _SUBLANE))
        b_pad = _round_up(B, tb)
        n_tiles = b_pad // tb

        # zero-pad input (batch rows + feature lanes) to the lane-dense width
        x_pad = jnp.zeros((b_pad, self.in_pad), jnp.float32).at[:B, :self.input_dim].set(x)

        args = [x_pad]
        in_specs = [pl.BlockSpec((tb, self.in_pad), lambda i: (i, 0))]
        for w, b in packed:
            args += [w, b]
            # constant index_map -> weights/biases stay VMEM-resident across
            # grid steps (no per-tile re-DMA)
            in_specs += [
                pl.BlockSpec(w.shape, lambda i: (0, 0)),
                pl.BlockSpec(b.shape, lambda i: (0, 0)),
            ]
        out_specs = pl.BlockSpec((tb, self.out_pad), lambda i: (i, 0))

        # advisory cost estimate for XLA scheduling around the custom call
        w_elems = sum(int(w.size) for w, _ in packed)
        b_elems = sum(int(b.size) for _, b in packed)
        flops = 2 * b_pad * sum(int(w.shape[0]) * int(w.shape[1]) for w, _ in packed)
        transc = b_pad * sum(_round_up(dout, _LANE) for _, _, _, dout in self.blocks)
        bytes_accessed = 4 * (b_pad * self.in_pad + b_pad * self.out_pad
                              + w_elems + b_elems)
        cost = pl.CostEstimate(flops=flops, transcendentals=transc,
                               bytes_accessed=bytes_accessed)

        out_pad = pl.pallas_call(
            _make_fused_kernel(self.kinds),
            out_shape=jax.ShapeDtypeStruct((b_pad, self.out_pad), jnp.float32),
            grid=(n_tiles,),
            in_specs=in_specs,
            out_specs=out_specs,
            compiler_params=pltpu.CompilerParams(
                dimension_semantics=("parallel",)),
            cost_estimate=cost,
        )(*args)
        # padded lanes are exactly 0 throughout; slice back to the true shape
        return out_pad[:B, :self.output_dim]


# ----------------------------------------------------------------------------
# Pure-JAX reference (uses the RAW, un-folded, un-padded parameters, exact f32)
# ----------------------------------------------------------------------------
def _reference_forward(model, x):
    apply_norm = model.use_norm and x.shape[0] > 1
    hi = jax.lax.Precision.HIGHEST
    for kind, p, _, _ in model.blocks:
        h = jnp.dot(x, p["w"], precision=hi) + p["b"]
        if apply_norm:
            h = (h - p["mean"]) * p["gamma"] * jax.lax.rsqrt(p["var"] + _EPS) + p["beta"]
        out = h * jax.nn.sigmoid(h)
        if kind == "res_identity":
            out = out + x
        elif kind == "res_proj":
            out = out + (jnp.dot(x, p["sw"], precision=hi) + p["sb"])
        x = out
    return x


if __name__ == "__main__":
    config = {
        "name": "res",  # residual blocks
        "params": {
            "input_dim": 32,
            "n_layers": 2,
            "n_units": 64,
            "structure": "constant",
            "dropout": 0.2,
            "output_dim": 16,
            "activation": "silu",
            "use_norm": True,
        },
    }

    key = jax.random.PRNGKey(0)
    key, k_x = jax.random.split(key)
    model = MLPCSVExtractorPallas(config, key)

    batch = 8
    x = jax.random.normal(k_x, (batch, config["params"]["input_dim"]), jnp.float32)

    out = model(x)
    out = jax.block_until_ready(out)

    ref = _reference_forward(model, x)
    assert out.shape == (batch, model.output_dim)
    # kernel uses DEFAULT (single-pass bf16 MXU, f32 accum) matmuls; the exact
    # f32 reference differs at the ~1e-3 relative level, so compare loosely.
    assert jnp.allclose(out, ref, atol=2e-2, rtol=2e-2), "mismatch vs reference"

    print("KERNEL_OK")
</pallas_src>

<mosaic_0001>
module attributes {stable_mosaic.version = 11 : i64} {
  func.func @kernel(%arg0: i32, %arg1: memref<8x128xf32, #tpu.memory_space<vmem>>, %arg2: memref<128x256xf32, #tpu.memory_space<vmem>>, %arg3: memref<1x256xf32, #tpu.memory_space<vmem>>, %arg4: memref<128x128xf32, #tpu.memory_space<vmem>>, %arg5: memref<1x128xf32, #tpu.memory_space<vmem>>, %arg6: memref<128x256xf32, #tpu.memory_space<vmem>>, %arg7: memref<1x256xf32, #tpu.memory_space<vmem>>, %arg8: memref<8x128xf32, #tpu.memory_space<vmem>>) attributes {dimension_semantics = [#tpu.dimension_semantics<parallel>], iteration_bounds = array<i64: 1>, scalar_prefetch = 0 : i64, scratch_operands = 0 : i64, tpu.core_type = #tpu.core_type<tc>, window_params = [{transform_indices = @transform_0, window_bounds = array<i64: 8, 128>}, {pipeline_mode = #tpu.pipeline_mode<synchronous>, transform_indices = @transform_1, window_bounds = array<i64: 128, 256>}, {pipeline_mode = #tpu.pipeline_mode<synchronous>, transform_indices = @transform_2, window_bounds = array<i64: 1, 256>}, {pipeline_mode = #tpu.pipeline_mode<synchronous>, transform_indices = @transform_3, window_bounds = array<i64: 128, 128>}, {pipeline_mode = #tpu.pipeline_mode<synchronous>, transform_indices = @transform_4, window_bounds = array<i64: 1, 128>}, {pipeline_mode = #tpu.pipeline_mode<synchronous>, transform_indices = @transform_5, window_bounds = array<i64: 128, 256>}, {pipeline_mode = #tpu.pipeline_mode<synchronous>, transform_indices = @transform_6, window_bounds = array<i64: 1, 256>}, {transform_indices = @transform_7, window_bounds = array<i64: 8, 128>}]} {
    %c0 = arith.constant 0 : index
    %c0_0 = arith.constant 0 : index
    %0 = vector.load %arg1[%c0, %c0_0] : memref<8x128xf32, #tpu.memory_space<vmem>>, vector<8x128xf32>
    %c0_1 = arith.constant 0 : index
    %c0_2 = arith.constant 0 : index
    %1 = vector.load %arg2[%c0_1, %c0_2] : memref<128x256xf32, #tpu.memory_space<vmem>>, vector<128x256xf32>
    %c0_3 = arith.constant 0 : index
    %c0_4 = arith.constant 0 : index
    %2 = vector.load %arg3[%c0_3, %c0_4] : memref<1x256xf32, #tpu.memory_space<vmem>>, vector<1x256xf32>
    %cst = arith.constant dense<0.000000e+00> : vector<8x256xf32>
    %3 = tpu.matmul %0, %1, %cst {dimension_numbers = #tpu.dot_dimension_numbers<[1], [0], [0], [1], [0, 0, 1, 1], [], []>} : vector<8x128xf32>, vector<128x256xf32>, vector<8x256xf32> -> vector<8x256xf32>
    %4 = vector.broadcast %2 : vector<1x256xf32> to vector<8x256xf32>
    %5 = arith.addf %3, %4 : vector<8x256xf32>
    %6 = vector.extract_strided_slice %5 {offsets = [0, 0], sizes = [8, 128], strides = [1, 1]} : vector<8x256xf32> to vector<8x128xf32>
    %7 = vector.extract_strided_slice %5 {offsets = [0, 128], sizes = [8, 128], strides = [1, 1]} : vector<8x256xf32> to vector<8x128xf32>
    %8 = arith.negf %6 : vector<8x128xf32>
    %9 = math.exp %8 : vector<8x128xf32>
    %cst_5 = arith.constant 1.000000e+00 : f32
    %10 = vector.broadcast %cst_5 : f32 to vector<8x128xf32>
    %11 = arith.addf %10, %9 : vector<8x128xf32>
    %12 = arith.divf %10, %11 : vector<8x128xf32>
    %13 = arith.mulf %6, %12 : vector<8x128xf32>
    %14 = arith.addf %13, %7 : vector<8x128xf32>
    %c0_6 = arith.constant 0 : index
    %c0_7 = arith.constant 0 : index
    %15 = vector.load %arg4[%c0_6, %c0_7] : memref<128x128xf32, #tpu.memory_space<vmem>>, vector<128x128xf32>
    %c0_8 = arith.constant 0 : index
    %c0_9 = arith.constant 0 : index
    %16 = vector.load %arg5[%c0_8, %c0_9] : memref<1x128xf32, #tpu.memory_space<vmem>>, vector<1x128xf32>
    %cst_10 = arith.constant dense<0.000000e+00> : vector<8x128xf32>
    %17 = tpu.matmul %14, %15, %cst_10 {dimension_numbers = #tpu.dot_dimension_numbers<[1], [0], [0], [1], [0, 0, 1, 1], [], []>} : vector<8x128xf32>, vector<128x128xf32>, vector<8x128xf32> -> vector<8x128xf32>
    %18 = vector.broadcast %16 : vector<1x128xf32> to vector<8x128xf32>
    %19 = arith.addf %17, %18 : vector<8x128xf32>
    %20 = arith.negf %19 : vector<8x128xf32>
    %21 = math.exp %20 : vector<8x128xf32>
    %cst_11 = arith.constant 1.000000e+00 : f32
    %22 = vector.broadcast %cst_11 : f32 to vector<8x128xf32>
    %23 = arith.addf %22, %21 : vector<8x128xf32>
    %24 = arith.divf %22, %23 : vector<8x128xf32>
    %25 = arith.mulf %19, %24 : vector<8x128xf32>
    %26 = arith.addf %25, %14 : vector<8x128xf32>
    %c0_12 = arith.constant 0 : index
    %c0_13 = arith.constant 0 : index
    %27 = vector.load %arg6[%c0_12, %c0_13] : memref<128x256xf32, #tpu.memory_space<vmem>>, vector<128x256xf32>
    %c0_14 = arith.constant 0 : index
    %c0_15 = arith.constant 0 : index
    %28 = vector.load %arg7[%c0_14, %c0_15] : memref<1x256xf32, #tpu.memory_space<vmem>>, vector<1x256xf32>
    %cst_16 = arith.constant dense<0.000000e+00> : vector<8x256xf32>
    %29 = tpu.matmul %26, %27, %cst_16 {dimension_numbers = #tpu.dot_dimension_numbers<[1], [0], [0], [1], [0, 0, 1, 1], [], []>} : vector<8x128xf32>, vector<128x256xf32>, vector<8x256xf32> -> vector<8x256xf32>
    %30 = vector.broadcast %28 : vector<1x256xf32> to vector<8x256xf32>
    %31 = arith.addf %29, %30 : vector<8x256xf32>
    %32 = vector.extract_strided_slice %31 {offsets = [0, 0], sizes = [8, 128], strides = [1, 1]} : vector<8x256xf32> to vector<8x128xf32>
    %33 = vector.extract_strided_slice %31 {offsets = [0, 128], sizes = [8, 128], strides = [1, 1]} : vector<8x256xf32> to vector<8x128xf32>
    %34 = arith.negf %32 : vector<8x128xf32>
    %35 = math.exp %34 : vector<8x128xf32>
    %cst_17 = arith.constant 1.000000e+00 : f32
    %36 = vector.broadcast %cst_17 : f32 to vector<8x128xf32>
    %37 = arith.addf %36, %35 : vector<8x128xf32>
    %38 = arith.divf %36, %37 : vector<8x128xf32>
    %39 = arith.mulf %32, %38 : vector<8x128xf32>
    %40 = arith.addf %39, %33 : vector<8x128xf32>
    %c0_18 = arith.constant 0 : index
    %c0_19 = arith.constant 0 : index
    %41 = vector.load %arg8[%c0_18, %c0_19] : memref<8x128xf32, #tpu.memory_space<vmem>>, vector<8x128xf32>
    tpu.vector_store %arg8[%c0_18, %c0_19], %40 {strides = array<i32>} : memref<8x128xf32, #tpu.memory_space<vmem>>, vector<8x128xf32>,
    return
  }
  func.func @transform_0(%arg0: i32) -> (i32, i32) {
    %c0_i32 = arith.constant 0 : i32
    %c0_i32_0 = arith.constant 0 : i32
    return %arg0, %c0_i32 : i32, i32
  }
  func.func @transform_1(%arg0: i32) -> (i32, i32) {
    %c0_i32 = arith.constant 0 : i32
    %c0_i32_0 = arith.constant 0 : i32
    %c0_i32_1 = arith.constant 0 : i32
    return %c0_i32, %c0_i32_0 : i32, i32
  }
  func.func @transform_2(%arg0: i32) -> (i32, i32) {
    %c0_i32 = arith.constant 0 : i32
    %c0_i32_0 = arith.constant 0 : i32
    %c0_i32_1 = arith.constant 0 : i32
    return %c0_i32, %c0_i32_0 : i32, i32
  }
  func.func @transform_3(%arg0: i32) -> (i32, i32) {
    %c0_i32 = arith.constant 0 : i32
    %c0_i32_0 = arith.constant 0 : i32
    %c0_i32_1 = arith.constant 0 : i32
    return %c0_i32, %c0_i32_0 : i32, i32
  }
  func.func @transform_4(%arg0: i32) -> (i32, i32) {
    %c0_i32 = arith.constant 0 : i32
    %c0_i32_0 = arith.constant 0 : i32
    %c0_i32_1 = arith.constant 0 : i32
    return %c0_i32, %c0_i32_0 : i32, i32
  }
  func.func @transform_5(%arg0: i32) -> (i32, i32) {
    %c0_i32 = arith.constant 0 : i32
    %c0_i32_0 = arith.constant 0 : i32
    %c0_i32_1 = arith.constant 0 : i32
    return %c0_i32, %c0_i32_0 : i32, i32
  }
  func.func @transform_6(%arg0: i32) -> (i32, i32) {
    %c0_i32 = arith.constant 0 : i32
    %c0_i32_0 = arith.constant 0 : i32
    %c0_i32_1 = arith.constant 0 : i32
    return %c0_i32, %c0_i32_0 : i32, i32
  }
  func.func @transform_7(%arg0: i32) -> (i32, i32) {
    %c0_i32 = arith.constant 0 : i32
    %c0_i32_0 = arith.constant 0 : i32
    return %arg0, %c0_i32 : i32, i32
  }
}

</mosaic_0001>

<llo_original>
// kernel: tpu_custom_call.1
$region0: #{tpu_custom_call.1}
  #allocation0 [shape = 'u32[]', space=smem, size = 0x4, offset = 0x4, fixed_abs, tag = 'smem constant byte address 0x4 - core index']
  #allocation1 [shape = 'u32[144,128]{1,0:T(1,128)}', space=vmem, size = 0x12000, scoped, tag = 'internal scratch']
  %s0 = inlined_call_operand.hbm [shape: f32[8,128], index: 0, kind: input, shape index: {}]
  %s1 = inlined_call_operand.hbm [shape: f32[128,256], index: 1, kind: input, shape index: {}]
  %s2 = inlined_call_operand.vmem [shape: f32[1,256], index: 2, kind: input, shape index: {}]
  %s3 = inlined_call_operand.hbm [shape: f32[128,128], index: 3, kind: input, shape index: {}]
  %s4 = inlined_call_operand.vmem [shape: f32[1,128], index: 4, kind: input, shape index: {}]
  %s5 = inlined_call_operand.hbm [shape: f32[128,256], index: 5, kind: input, shape index: {}]
  %s6 = inlined_call_operand.vmem [shape: f32[1,256], index: 6, kind: input, shape index: {}]
  %s7 = inlined_call_operand.hbm [shape: f32[8,128], index: 7, kind: output, shape index: {}]
  %s8 = sld [smem:[#allocation0]]
  $region54: #{tpu_custom_call.1} parent=0
    _
  %s10 = ssub.s32 1, %s8
  %s11 = scalar_select 0, %s10, %s8
  $region1: #{tpu_custom_call.1} parent=0
    #allocation2 [shape = 'u8[4096]{0}', space=vmem, size = 0x1000, scoped, tag = 'input window, operand 0, single buffered']
    #allocation3 [shape = 's32[1]{0}', space=sflag, size = 0x4, scoped, tag = 'scoped memory for tpu_custom_call.1']
    #allocation4 [shape = 's32[1]{0}', space=sflag, size = 0x4, scoped, tag = 'scoped memory for tpu_custom_call.1']
    #allocation5 [shape = 'u8[131072]{0}', space=vmem, size = 0x20000, scoped, tag = 'input window, operand 1, single buffered']
    #allocation6 [shape = 's32[1]{0}', space=sflag, size = 0x4, scoped, tag = 'scoped memory for tpu_custom_call.1']
    #allocation7 [shape = 'u8[65536]{0}', space=vmem, size = 0x10000, scoped, tag = 'input window, operand 3, single buffered']
    #allocation8 [shape = 'u8[131072]{0}', space=vmem, size = 0x20000, scoped, tag = 'input window, operand 5, single buffered']
    #allocation9 [shape = 's32[1]{0}', space=sflag, size = 0x4, scoped, tag = 'scoped memory for tpu_custom_call.1']
    #allocation10 [shape = 'u8[4096]{0}', space=vmem, size = 0x1000, scoped, tag = 'output window, operand 0, single buffered']
    %12 = vsyncpa [#allocation3], 0
    %13 = vsyncpa [#allocation6], 0
    %14 = vsyncpa [#allocation9], 0
    %15 = vsyncpa [#allocation4], 0
    // Predicated region
    $region2: #{tpu_custom_call.1} parent=1 // pred_check
      _
    $region3: #{tpu_custom_call.1} parent=1 // pred_check_branch
      %17 = sbr.rel (0) target = $region5
    $region4: #{tpu_custom_call.1} parent=1 // pred_region
      %s19 = ssub.s32 128, 128
      %20 = vsyncadd [#allocation3], %s19
      %s22 = sshll.u32 [#allocation2], 4
      %s23 = int_to_ptr.vmem [resolvable:$true] %s22
      %25 = dma.hbm_to_vmem [thread:$0]  %s0, 128, %s23, [#allocation3]
    $region5: #{tpu_custom_call.1} parent=1 // pred_fallthru
      _
    // Predicated region
    $region6: #{tpu_custom_call.1} parent=1 // pred_check
      _
    $region7: #{tpu_custom_call.1} parent=1 // pred_check_branch
      %27 = sbr.rel (0) target = $region9
    $region8: #{tpu_custom_call.1} parent=1 // pred_region
      %s29 = ssub.s32 4096, 4096
      %30 = vsyncadd [#allocation6], %s29
      %s31 = sshll.u32 [#allocation5], 4
      %s32 = int_to_ptr.vmem [resolvable:$true] %s31
      %37 = dma.hbm_to_vmem [thread:$0]  %s1, 4096, %s32, [#allocation6], 256, 256, 16
    $region9: #{tpu_custom_call.1} parent=1 // pred_fallthru
      _
    // Predicated region
    $region10: #{tpu_custom_call.1} parent=1 // pred_check
      _
    $region11: #{tpu_custom_call.1} parent=1 // pred_check_branch
      %39 = sbr.rel (0) target = $region13
    $region12: #{tpu_custom_call.1} parent=1 // pred_region
      _
    $region13: #{tpu_custom_call.1} parent=1 // pred_fallthru
      _
    // Predicated region
    $region14: #{tpu_custom_call.1} parent=1 // pred_check
      _
    $region15: #{tpu_custom_call.1} parent=1 // pred_check_branch
      %41 = sbr.rel (0) target = $region17
    $region16: #{tpu_custom_call.1} parent=1 // pred_region
      %s43 = ssub.s32 2048, 2048
      %44 = vsyncadd [#allocation6], %s43
      %s45 = sshll.u32 [#allocation7], 4
      %s46 = int_to_ptr.vmem [resolvable:$true] %s45
      %51 = dma.hbm_to_vmem [thread:$0]  %s3, 2048, %s46, [#allocation6], 128, 128, 8
    $region17: #{tpu_custom_call.1} parent=1 // pred_fallthru
      _
    // Predicated region
    $region18: #{tpu_custom_call.1} parent=1 // pred_check
      _
    $region19: #{tpu_custom_call.1} parent=1 // pred_check_branch
      %53 = sbr.rel (0) target = $region21
    $region20: #{tpu_custom_call.1} parent=1 // pred_region
      _
    $region21: #{tpu_custom_call.1} parent=1 // pred_fallthru
      _
    // Predicated region
    $region22: #{tpu_custom_call.1} parent=1 // pred_check
      _
    $region23: #{tpu_custom_call.1} parent=1 // pred_check_branch
      %55 = sbr.rel (0) target = $region25
    $region24: #{tpu_custom_call.1} parent=1 // pred_region
      %s57 = ssub.s32 4096, 4096
      %58 = vsyncadd [#allocation9], %s57
      %s59 = sshll.u32 [#allocation8], 4
      %s60 = int_to_ptr.vmem [resolvable:$true] %s59
      %65 = dma.hbm_to_vmem [thread:$0]  %s5, 4096, %s60, [#allocation9], 256, 256, 16
    $region25: #{tpu_custom_call.1} parent=1 // pred_fallthru
      _
    // Predicated region
    $region26: #{tpu_custom_call.1} parent=1 // pred_check
      _
    $region27: #{tpu_custom_call.1} parent=1 // pred_check_branch
      %67 = sbr.rel (0) target = $region29
    $region28: #{tpu_custom_call.1} parent=1 // pred_region
      _
    $region29: #{tpu_custom_call.1} parent=1 // pred_fallthru
      _
    // Predicated region
    $region30: #{tpu_custom_call.1} parent=1 // pred_check
      _
    $region31: #{tpu_custom_call.1} parent=1 // pred_check_branch
      %69 = sbr.rel (0) target = $region33
    $region32: #{tpu_custom_call.1} parent=1 // pred_region
      %70 = dma.done [#allocation3], 128
    $region33: #{tpu_custom_call.1} parent=1 // pred_fallthru
      _
    // Predicated region
    $region34: #{tpu_custom_call.1} parent=1 // pred_check
      _
    $region35: #{tpu_custom_call.1} parent=1 // pred_check_branch
      %72 = sbr.rel (0) target = $region37
    $region36: #{tpu_custom_call.1} parent=1 // pred_region
      %73 = dma.done [#allocation6], 4096
    $region37: #{tpu_custom_call.1} parent=1 // pred_fallthru
      _
    // Predicated region
    $region38: #{tpu_custom_call.1} parent=1 // pred_check
      _
    $region39: #{tpu_custom_call.1} parent=1 // pred_check_branch
      %75 = sbr.rel (0) target = $region41
    $region40: #{tpu_custom_call.1} parent=1 // pred_region
      %76 = dma.done [#allocation6], 2048
    $region41: #{tpu_custom_call.1} parent=1 // pred_fallthru
      _
    // Predicated region
    $region42: #{tpu_custom_call.1} parent=1 // pred_check
      _
    $region43: #{tpu_custom_call.1} parent=1 // pred_check_branch
      %78 = sbr.rel (0) target = $region45
    $region44: #{tpu_custom_call.1} parent=1 // pred_region
      %79 = dma.done [#allocation9], 4096
    $region45: #{tpu_custom_call.1} parent=1 // pred_fallthru
      _
    %v80 = vld [vmem:[#allocation2] sm:$0xff]
    %v81 = vld [vmem:[#allocation5] sm:$0xff]
    %v82 = vld [vmem:[#allocation5 + $0x8] sm:$0xff]
    %v83 = vld [vmem:[#allocation5 + $0x10] sm:$0xff]
    %v84 = vld [vmem:[#allocation5 + $0x18] sm:$0xff]
    %v85 = vld [vmem:[#allocation5 + $0x20] sm:$0xff]
    %v86 = vld [vmem:[#allocation5 + $0x28] sm:$0xff]
    %v87 = vld [vmem:[#allocation5 + $0x30] sm:$0xff]
    %v88 = vld [vmem:[#allocation5 + $0x38] sm:$0xff]
    %v89 = vld [vmem:[#allocation5 + $0x40] sm:$0xff]
    %v90 = vld [vmem:[#allocation5 + $0x48] sm:$0xff]
    %v91 = vld [vmem:[#allocation5 + $0x50] sm:$0xff]
    %v92 = vld [vmem:[#allocation5 + $0x58] sm:$0xff]
    %v93 = vld [vmem:[#allocation5 + $0x60] sm:$0xff]
    %v94 = vld [vmem:[#allocation5 + $0x68] sm:$0xff]
    %v95 = vld [vmem:[#allocation5 + $0x70] sm:$0xff]
    %v96 = vld [vmem:[#allocation5 + $0x78] sm:$0xff]
    %v97 = vld [vmem:[#allocation5 + $0x80] sm:$0xff]
    %v98 = vld [vmem:[#allocation5 + $0x88] sm:$0xff]
    %v99 = vld [vmem:[#allocation5 + $0x90] sm:$0xff]
    %v100 = vld [vmem:[#allocation5 + $0x98] sm:$0xff]
    %v101 = vld [vmem:[#allocation5 + $0xa0] sm:$0xff]
    %v102 = vld [vmem:[#allocation5 + $0xa8] sm:$0xff]
    %v103 = vld [vmem:[#allocation5 + $0xb0] sm:$0xff]
    %v104 = vld [vmem:[#allocation5 + $0xb8] sm:$0xff]
    %v105 = vld [vmem:[#allocation5 + $0xc0] sm:$0xff]
    %v106 = vld [vmem:[#allocation5 + $0xc8] sm:$0xff]
    %v107 = vld [vmem:[#allocation5 + $0xd0] sm:$0xff]
    %v108 = vld [vmem:[#allocation5 + $0xd8] sm:$0xff]
    %v109 = vld [vmem:[#allocation5 + $0xe0] sm:$0xff]
    %v110 = vld [vmem:[#allocation5 + $0xe8] sm:$0xff]
    %v111 = vld [vmem:[#allocation5 + $0xf0] sm:$0xff]
    %v112 = vld [vmem:[#allocation5 + $0xf8] sm:$0xff]
    %v113 = vld [vmem:[%s2] sm:$0x3]
    %v115 = vlaneseq
    %v116 = vshrl.u32 %v115, 7
    %v117 = vsub.s32 0, %v116
    %v118 = vrot.slane %v113, %v117
    %v119 = vlaneseq
    %v120 = vshrl.u32 %v119, 7
    %v121 = vsub.s32 1, %v120
    %v122 = vrot.slane %v113, %v121
    %125 = vmatprep.subr.mxu0 %v112
    %126 = vmatpush1.msra.mxu0 %v111
    %127 = vmatprep.subr.mxu0 %v110
    %128 = vmatpush1.msra.mxu0 %v109
    %129 = vmatprep.subr.mxu0 %v108
    %130 = vmatpush1.msra.mxu0 %v107
    %131 = vmatprep.subr.mxu0 %v106
    %132 = vmatpush1.msra.mxu0 %v105
    %133 = vmatprep.subr.mxu0 %v104
    %134 = vmatpush1.msra.mxu0 %v103
    %135 = vmatprep.subr.mxu0 %v102
    %136 = vmatpush1.msra.mxu0 %v101
    %137 = vmatprep.subr.mxu0 %v100
    %138 = vmatpush1.msra.mxu0 %v99
    %139 = vmatprep.subr.mxu0 %v98
    %140 = vmatpush1.msra.mxu0 %v97
    %141 = vmatprep.subr.mxu0 %v96
    %142 = vmatpush1.msra.mxu0 %v95
    %143 = vmatprep.subr.mxu0 %v94
    %144 = vmatpush1.msra.mxu0 %v93
    %145 = vmatprep.subr.mxu0 %v92
    %146 = vmatpush1.msra.mxu0 %v91
    %147 = vmatprep.subr.mxu0 %v90
    %148 = vmatpush1.msra.mxu0 %v89
    %149 = vmatprep.subr.mxu0 %v88
    %150 = vmatpush1.msra.mxu0 %v87
    %151 = vmatprep.subr.mxu0 %v86
    %152 = vmatpush1.msra.mxu0 %v85
    %153 = vmatprep.subr.mxu0 %v84
    %154 = vmatpush1.msra.mxu0 %v83
    %155 = vmatprep.subr.mxu0 %v82
    %156 = vmatpush1.msra.mxu0 %v81
    %157 = vmatprep.subr.mxu0 0.0
    %158 = vmatpush2.msra.mxu0 0.0
    %159 = vmatprep.subr.mxu0 0.0
    %160 = vmatpush2.msra.mxu0 0.0
    %161 = vmatprep.subr.mxu0 0.0
    %162 = vmatpush2.msra.mxu0 0.0
    %163 = vmatprep.subr.mxu0 0.0
    %164 = vmatpush2.msra.mxu0 0.0
    %165 = vmatprep.subr.mxu0 0.0
    %166 = vmatpush2.msra.mxu0 0.0
    %167 = vmatprep.subr.mxu0 0.0
    %168 = vmatpush2.msra.mxu0 0.0
    %169 = vmatprep.subr.mxu0 0.0
    %170 = vmatpush2.msra.mxu0 0.0
    %171 = vmatprep.subr.mxu0 0.0
    %172 = vmatpush2.msra.mxu0 0.0
    %173 = vmatprep.subr.mxu0 0.0
    %174 = vmatpush2.msra.mxu0 0.0
    %175 = vmatprep.subr.mxu0 0.0
    %176 = vmatpush2.msra.mxu0 0.0
    %177 = vmatprep.subr.mxu0 0.0
    %178 = vmatpush2.msra.mxu0 0.0
    %179 = vmatprep.subr.mxu0 0.0
    %180 = vmatpush2.msra.mxu0 0.0
    %181 = vmatprep.subr.mxu0 0.0
    %182 = vmatpush2.msra.mxu0 0.0
    %183 = vmatprep.subr.mxu0 0.0
    %184 = vmatpush2.msra.mxu0 0.0
    %185 = vmatprep.subr.mxu0 0.0
    %186 = vmatpush2.msra.mxu0 0.0
    %187 = vmatprep.subr.mxu0 0.0
    %188 = vmatpush2.msra.mxu0 0.0
    %189 = vmatprep.mubr.f32.mxu0 0.0
    %190 = vmatmul.mubr.f32.gmra.mxu0 %v80
    %v191 = vpop.f32.mrf.mxu0
    %v192 = vadd.f32 %v118, %v191
    %v193 = vpop.f32.mrf.mxu0
    %v194 = vadd.f32 %v122, %v193
    %195 = vdwg.mxu0
    %v196 = vxor.u32 %v192, 2147483648
    %v197 = vmul.f32 %v196, 1.442695
    %v198 = vpow.pop %v197
    %v199 = vadd.f32 %v198, 1.0
    %v200 = vrcp.pop %v199
    %v201 = vmul.f32 1.0, %v200
    %v202 = vmul.f32 %v192, %v201
    %v203 = vadd.f32 %v202, %v194
    %v204 = vld [vmem:[#allocation7] sm:$0xff]
    %v205 = vld [vmem:[#allocation7 + $0x8] sm:$0xff]
    %v206 = vld [vmem:[#allocation7 + $0x10] sm:$0xff]
    %v207 = vld [vmem:[#allocation7 + $0x18] sm:$0xff]
    %v208 = vld [vmem:[#allocation7 + $0x20] sm:$0xff]
    %v209 = vld [vmem:[#allocation7 + $0x28] sm:$0xff]
    %v210 = vld [vmem:[#allocation7 + $0x30] sm:$0xff]
    %v211 = vld [vmem:[#allocation7 + $0x38] sm:$0xff]
    %v212 = vld [vmem:[#allocation7 + $0x40] sm:$0xff]
    %v213 = vld [vmem:[#allocation7 + $0x48] sm:$0xff]
    %v214 = vld [vmem:[#allocation7 + $0x50] sm:$0xff]
    %v215 = vld [vmem:[#allocation7 + $0x58] sm:$0xff]
    %v216 = vld [vmem:[#allocation7 + $0x60] sm:$0xff]
    %v217 = vld [vmem:[#allocation7 + $0x68] sm:$0xff]
    %v218 = vld [vmem:[#allocation7 + $0x70] sm:$0xff]
    %v219 = vld [vmem:[#allocation7 + $0x78] sm:$0xff]
    %v220 = vld [vmem:[%s4] sm:$0x1]
    %v222 = vlaneseq
    %v223 = vshrl.u32 %v222, 7
    %v224 = vsub.s32 0, %v223
    %v225 = vrot.slane %v220, %v224
    %227 = vmatprep.subr.mxu0 0.0
    %228 = vmatpush1.msra.mxu0 %v219
    %229 = vmatprep.subr.mxu0 0.0
    %230 = vmatpush1.msra.mxu0 %v218
    %231 = vmatprep.subr.mxu0 0.0
    %232 = vmatpush1.msra.mxu0 %v217
    %233 = vmatprep.subr.mxu0 0.0
    %234 = vmatpush1.msra.mxu0 %v216
    %235 = vmatprep.subr.mxu0 0.0
    %236 = vmatpush1.msra.mxu0 %v215
    %237 = vmatprep.subr.mxu0 0.0
    %238 = vmatpush1.msra.mxu0 %v214
    %239 = vmatprep.subr.mxu0 0.0
    %240 = vmatpush1.msra.mxu0 %v213
    %241 = vmatprep.subr.mxu0 0.0
    %242 = vmatpush1.msra.mxu0 %v212
    %243 = vmatprep.subr.mxu0 0.0
    %244 = vmatpush1.msra.mxu0 %v211
    %245 = vmatprep.subr.mxu0 0.0
    %246 = vmatpush1.msra.mxu0 %v210
    %247 = vmatprep.subr.mxu0 0.0
    %248 = vmatpush1.msra.mxu0 %v209
    %249 = vmatprep.subr.mxu0 0.0
    %250 = vmatpush1.msra.mxu0 %v208
    %251 = vmatprep.subr.mxu0 0.0
    %252 = vmatpush1.msra.mxu0 %v207
    %253 = vmatprep.subr.mxu0 0.0
    %254 = vmatpush1.msra.mxu0 %v206
    %255 = vmatprep.subr.mxu0 0.0
    %256 = vmatpush1.msra.mxu0 %v205
    %257 = vmatprep.subr.mxu0 0.0
    %258 = vmatpush1.msra.mxu0 %v204
    %259 = vmatprep.subr.mxu0 0.0
    %260 = vmatpush2.msra.mxu0 0.0
    %261 = vmatprep.subr.mxu0 0.0
    %262 = vmatpush2.msra.mxu0 0.0
    %263 = vmatprep.subr.mxu0 0.0
    %264 = vmatpush2.msra.mxu0 0.0
    %265 = vmatprep.subr.mxu0 0.0
    %266 = vmatpush2.msra.mxu0 0.0
    %267 = vmatprep.subr.mxu0 0.0
    %268 = vmatpush2.msra.mxu0 0.0
    %269 = vmatprep.subr.mxu0 0.0
    %270 = vmatpush2.msra.mxu0 0.0
    %271 = vmatprep.subr.mxu0 0.0
    %272 = vmatpush2.msra.mxu0 0.0
    %273 = vmatprep.subr.mxu0 0.0
    %274 = vmatpush2.msra.mxu0 0.0
    %275 = vmatprep.subr.mxu0 0.0
    %276 = vmatpush2.msra.mxu0 0.0
    %277 = vmatprep.subr.mxu0 0.0
    %278 = vmatpush2.msra.mxu0 0.0
    %279 = vmatprep.subr.mxu0 0.0
    %280 = vmatpush2.msra.mxu0 0.0
    %281 = vmatprep.subr.mxu0 0.0
    %282 = vmatpush2.msra.mxu0 0.0
    %283 = vmatprep.subr.mxu0 0.0
    %284 = vmatpush2.msra.mxu0 0.0
    %285 = vmatprep.subr.mxu0 0.0
    %286 = vmatpush2.msra.mxu0 0.0
    %287 = vmatprep.subr.mxu0 0.0
    %288 = vmatpush2.msra.mxu0 0.0
    %289 = vmatprep.subr.mxu0 0.0
    %290 = vmatpush2.msra.mxu0 0.0
    %291 = vmatprep.mubr.f32.mxu0 0.0
    %292 = vmatmul.mubr.f32.gmra.mxu0 %v203
    %v293 = vpop.f32.mrf.mxu0
    %v294 = vadd.f32 %v225, %v293
    %v295 = vpop.f32.mrf.mxu0
    %296 = vdwg.mxu0
    %v297 = vxor.u32 %v294, 2147483648
    %v298 = vmul.f32 %v297, 1.442695
    %v299 = vpow.pop %v298
    %v300 = vadd.f32 %v299, 1.0
    %v301 = vrcp.pop %v300
    %v302 = vmul.f32 1.0, %v301
    %v303 = vmul.f32 %v294, %v302
    %v304 = vadd.f32 %v303, %v203
    %v305 = vld [vmem:[#allocation8] sm:$0xff]
    %v306 = vld [vmem:[#allocation8 + $0x8] sm:$0xff]
    %v307 = vld [vmem:[#allocation8 + $0x10] sm:$0xff]
    %v308 = vld [vmem:[#allocation8 + $0x18] sm:$0xff]
    %v309 = vld [vmem:[#allocation8 + $0x20] sm:$0xff]
    %v310 = vld [vmem:[#allocation8 + $0x28] sm:$0xff]
    %v311 = vld [vmem:[#allocation8 + $0x30] sm:$0xff]
    %v312 = vld [vmem:[#allocation8 + $0x38] sm:$0xff]
    %v313 = vld [vmem:[#allocation8 + $0x40] sm:$0xff]
    %v314 = vld [vmem:[#allocation8 + $0x48] sm:$0xff]
    %v315 = vld [vmem:[#allocation8 + $0x50] sm:$0xff]
    %v316 = vld [vmem:[#allocation8 + $0x58] sm:$0xff]
    %v317 = vld [vmem:[#allocation8 + $0x60] sm:$0xff]
    %v318 = vld [vmem:[#allocation8 + $0x68] sm:$0xff]
    %v319 = vld [vmem:[#allocation8 + $0x70] sm:$0xff]
    %v320 = vld [vmem:[#allocation8 + $0x78] sm:$0xff]
    %v321 = vld [vmem:[#allocation8 + $0x80] sm:$0xff]
    %v322 = vld [vmem:[#allocation8 + $0x88] sm:$0xff]
    %v323 = vld [vmem:[#allocation8 + $0x90] sm:$0xff]
    %v324 = vld [vmem:[#allocation8 + $0x98] sm:$0xff]
    %v325 = vld [vmem:[#allocation8 + $0xa0] sm:$0xff]
    %v326 = vld [vmem:[#allocation8 + $0xa8] sm:$0xff]
    %v327 = vld [vmem:[#allocation8 + $0xb0] sm:$0xff]
    %v328 = vld [vmem:[#allocation8 + $0xb8] sm:$0xff]
    %v329 = vld [vmem:[#allocation8 + $0xc0] sm:$0xff]
    %v330 = vld [vmem:[#allocation8 + $0xc8] sm:$0xff]
    %v331 = vld [vmem:[#allocation8 + $0xd0] sm:$0xff]
    %v332 = vld [vmem:[#allocation8 + $0xd8] sm:$0xff]
    %v333 = vld [vmem:[#allocation8 + $0xe0] sm:$0xff]
    %v334 = vld [vmem:[#allocation8 + $0xe8] sm:$0xff]
    %v335 = vld [vmem:[#allocation8 + $0xf0] sm:$0xff]
    %v336 = vld [vmem:[#allocation8 + $0xf8] sm:$0xff]
    %v337 = vld [vmem:[%s6] sm:$0x3]
    %v339 = vlaneseq
    %v340 = vshrl.u32 %v339, 7
    %v341 = vsub.s32 0, %v340
    %v342 = vrot.slane %v337, %v341
    %v343 = vlaneseq
    %v344 = vshrl.u32 %v343, 7
    %v345 = vsub.s32 1, %v344
    %v346 = vrot.slane %v337, %v345
    %349 = vmatprep.subr.mxu0 %v336
    %350 = vmatpush1.msra.mxu0 %v335
    %351 = vmatprep.subr.mxu0 %v334
    %352 = vmatpush1.msra.mxu0 %v333
    %353 = vmatprep.subr.mxu0 %v332
    %354 = vmatpush1.msra.mxu0 %v331
    %355 = vmatprep.subr.mxu0 %v330
    %356 = vmatpush1.msra.mxu0 %v329
    %357 = vmatprep.subr.mxu0 %v328
    %358 = vmatpush1.msra.mxu0 %v327
    %359 = vmatprep.subr.mxu0 %v326
    %360 = vmatpush1.msra.mxu0 %v325
    %361 = vmatprep.subr.mxu0 %v324
    %362 = vmatpush1.msra.mxu0 %v323
    %363 = vmatprep.subr.mxu0 %v322
    %364 = vmatpush1.msra.mxu0 %v321
    %365 = vmatprep.subr.mxu0 %v320
    %366 = vmatpush1.msra.mxu0 %v319
    %367 = vmatprep.subr.mxu0 %v318
    %368 = vmatpush1.msra.mxu0 %v317
    %369 = vmatprep.subr.mxu0 %v316
    %370 = vmatpush1.msra.mxu0 %v315
    %371 = vmatprep.subr.mxu0 %v314
    %372 = vmatpush1.msra.mxu0 %v313
    %373 = vmatprep.subr.mxu0 %v312
    %374 = vmatpush1.msra.mxu0 %v311
    %375 = vmatprep.subr.mxu0 %v310
    %376 = vmatpush1.msra.mxu0 %v309
    %377 = vmatprep.subr.mxu0 %v308
    %378 = vmatpush1.msra.mxu0 %v307
    %379 = vmatprep.subr.mxu0 %v306
    %380 = vmatpush1.msra.mxu0 %v305
    %381 = vmatprep.subr.mxu0 0.0
    %382 = vmatpush2.msra.mxu0 0.0
    %383 = vmatprep.subr.mxu0 0.0
    %384 = vmatpush2.msra.mxu0 0.0
    %385 = vmatprep.subr.mxu0 0.0
    %386 = vmatpush2.msra.mxu0 0.0
    %387 = vmatprep.subr.mxu0 0.0
    %388 = vmatpush2.msra.mxu0 0.0
    %389 = vmatprep.subr.mxu0 0.0
    %390 = vmatpush2.msra.mxu0 0.0
    %391 = vmatprep.subr.mxu0 0.0
    %392 = vmatpush2.msra.mxu0 0.0
    %393 = vmatprep.subr.mxu0 0.0
    %394 = vmatpush2.msra.mxu0 0.0
    %395 = vmatprep.subr.mxu0 0.0
    %396 = vmatpush2.msra.mxu0 0.0
    %397 = vmatprep.subr.mxu0 0.0
    %398 = vmatpush2.msra.mxu0 0.0
    %399 = vmatprep.subr.mxu0 0.0
    %400 = vmatpush2.msra.mxu0 0.0
    %401 = vmatprep.subr.mxu0 0.0
    %402 = vmatpush2.msra.mxu0 0.0
    %403 = vmatprep.subr.mxu0 0.0
    %404 = vmatpush2.msra.mxu0 0.0
    %405 = vmatprep.subr.mxu0 0.0
    %406 = vmatpush2.msra.mxu0 0.0
    %407 = vmatprep.subr.mxu0 0.0
    %408 = vmatpush2.msra.mxu0 0.0
    %409 = vmatprep.subr.mxu0 0.0
    %410 = vmatpush2.msra.mxu0 0.0
    %411 = vmatprep.subr.mxu0 0.0
    %412 = vmatpush2.msra.mxu0 0.0
    %413 = vmatprep.mubr.f32.mxu0 0.0
    %414 = vmatmul.mubr.f32.gmra.mxu0 %v304
    %v415 = vpop.f32.mrf.mxu0
    %v416 = vadd.f32 %v342, %v415
    %v417 = vpop.f32.mrf.mxu0
    %v418 = vadd.f32 %v346, %v417
    %419 = vdwg.mxu0
    %v420 = vxor.u32 %v416, 2147483648
    %v421 = vmul.f32 %v420, 1.442695
    %v422 = vpow.pop %v421
    %v423 = vadd.f32 %v422, 1.0
    %v424 = vrcp.pop %v423
    %v425 = vmul.f32 1.0, %v424
    %v426 = vmul.f32 %v416, %v425
    %v427 = vadd.f32 %v426, %v418
    %428 = vst [vmem:[#allocation10] sm:$0xff] %v427
    // Predicated region
    $region46: #{tpu_custom_call.1} parent=1 // pred_check
      _
    $region47: #{tpu_custom_call.1} parent=1 // pred_check_branch
      %430 = sbr.rel (0) target = $region49
    $region48: #{tpu_custom_call.1} parent=1 // pred_region
      %s432 = ssub.s32 128, 128
      %433 = vsyncadd [#allocation4], %s432
      %s435 = sshll.u32 [#allocation10], 4
      %s436 = int_to_ptr.vmem [resolvable:$true] %s435
      %438 = dma.vmem_to_hbm [thread:$0]  %s436, 128, %s7, [#allocation4]
    $region49: #{tpu_custom_call.1} parent=1 // pred_fallthru
      _
    // Predicated region
    $region50: #{tpu_custom_call.1} parent=1 // pred_check
      _
    $region51: #{tpu_custom_call.1} parent=1 // pred_check_branch
      %440 = sbr.rel (0) target = $region53
    $region52: #{tpu_custom_call.1} parent=1 // pred_region
      %441 = dma.done [#allocation4], 128
    $region53: #{tpu_custom_call.1} parent=1 // pred_fallthru
      _
    %442 = vsyncpa [#allocation3], 1
    %443 = vsyncpa [#allocation6], 1
    %444 = vsyncpa [#allocation9], 1
    %445 = vsyncpa [#allocation4], 1

</llo_original>
